<compile_context>
chip_gen: v7x
topology: tpu7x:2x2x1
jax: 0.10.0
libtpu: 0.0.40
codegen_flags: <defaults>
</compile_context>

<pallas_src>
import functools

import jax
import jax.numpy as jnp
from jax import lax
from jax.experimental import pallas as pl
from jax.experimental.pallas import tpu as pltpu


def _round_up(a, b):
    return (a + b - 1) // b * b


# ----------------------------------------------------------------------------
# Kernel: one MXU GEMM per grid step, fused bias + ReLU epilogue.
# ----------------------------------------------------------------------------
def _down_conv_kernel(x_ref, w_ref, b_ref, o_ref, *, apply_relu):
    # x_ref: (tm, K) bf16, w_ref: (K, N) bf16, b_ref: (1, N) f32, o_ref: (tm, N) f32
    out = jnp.dot(x_ref[...], w_ref[...], preferred_element_type=jnp.float32)
    out = out + b_ref[...]                 # single f32 bias add (broadcast over rows)
    if apply_relu:
        out = jnp.maximum(out, 0.0)
    o_ref[...] = out.astype(o_ref.dtype)


# ----------------------------------------------------------------------------
# Row-tile selection: biggest tile that fits VMEM, prefer even >=4 grid steps.
# ----------------------------------------------------------------------------
def _pick_block_rows(m_rows, per_row_bytes, fixed_bytes, budget,
                     row_align=16, min_steps=4):
    if m_rows <= row_align:
        return m_rows
    cands = [d for d in range(row_align, m_rows + 1, row_align) if m_rows % d == 0]
    if not cands:
        cands = [row_align]                # non-divisor -> masked last block
    cands = sorted(set(cands), reverse=True)

    def fits(tm):
        return fixed_bytes + tm * per_row_bytes <= budget

    # pass 1: largest fitting tile with an even grid of >= min_steps (v7x: 2 TCs)
    for tm in cands:
        steps = pl.cdiv(m_rows, tm)
        if fits(tm) and steps >= min_steps and steps % 2 == 0:
            return tm
    # pass 2: drop the "even" requirement (still keep pipeline depth)
    for tm in cands:
        if fits(tm) and pl.cdiv(m_rows, tm) >= min_steps:
            return tm
    # pass 3: anything that fits VMEM
    for tm in cands:
        if fits(tm):
            return tm
    return cands[-1]


# ----------------------------------------------------------------------------
# Wrapper: layout plumbing (free reshapes + one fusable relayout/cast pass).
# ----------------------------------------------------------------------------
def downsampling_conv_block(x, weight, bias, *, stride=2, relu=True):
    """x: [B, Cin, D, H, W] f32 (NCDHW); weight: [Cout, Cin, k, k, k] (PyTorch);
    bias: [Cout].  Returns [B, Cout, D//k, H//k, W//k] f32."""
    k = int(stride)
    B, Cin, D, H, W = x.shape
    Cout = weight.shape[0]
    Do, Ho, Wo = D // k, H // k, W // k
    assert min(Do, Ho, Wo) >= 1, "input spatially smaller than the kernel"

    # PyTorch floor semantics when spatial dims are not divisible by k.
    x = x[:, :, :Do * k, :Ho * k, :Wo * k]

    K = k * k * k * Cin                    # full k^3 tap fold -> MXU contraction
    M = B * Do * Ho * Wo                   # one row per output voxel

    # Row-grouping factor so the output last dim is lane-dense (>= 128) even
    # when Cout < 128; identity (g == 1) when Cout >= 128 or M not divisible.
    g = 1
    if Cout < 128:
        g_want = -(-128 // Cout)           # ceil(128 / Cout)
        if M % g_want == 0:
            g = g_want
    Kg, Ng, Mg = g * K, g * Cout, M // g

    # One relayout pass fused with the f32->bf16 cast; all reshapes are free.
    # NCDHW -> (B, Do, Ho, Wo, kd, kh, kw, Cin) -> (Mg, g*K).
    x8 = x.reshape(B, Cin, Do, k, Ho, k, Wo, k)
    x_cl = jnp.transpose(x8, (0, 2, 4, 6, 3, 5, 7, 1)).astype(jnp.bfloat16)
    xv = x_cl.reshape(Mg, Kg)

    # Weight: [Cout, Cin, kd, kh, kw] -> (kd, kh, kw, Cin, Cout) -> (K, Cout),
    # then block-diagonal expand to (g*K, g*Cout) for the row-grouping trick.
    wv = jnp.transpose(weight, (2, 3, 4, 1, 0)).reshape(K, Cout).astype(jnp.bfloat16)
    if g > 1:
        eye = jnp.eye(g, dtype=wv.dtype)
        wv = jnp.einsum('gh,kc->gkhc', eye, wv).reshape(Kg, Ng)
    bv = jnp.tile(bias.astype(jnp.float32).reshape(1, Cout), (1, g))   # (1, Ng)

    # --- VMEM budgeting (chip-aware: 128 MiB v5e/v6e, 64 MiB v7x) -----------
    try:
        vmem_cap = int(pltpu.get_tpu_info().vmem_capacity_bytes)
    except Exception:
        vmem_cap = 64 * 1024 * 1024        # conservative (v7x) fallback
    vmem_limit = min(vmem_cap * 3 // 4, 100 * 1024 * 1024)
    budget = int(vmem_limit * 0.85)        # headroom for compiler scratch

    kp = _round_up(Kg, 128)                # lane padding of the A tile
    np_ = _round_up(Ng, 128)               # lane padding of the out tile
    in_row_bytes = kp * 2                  # bf16 A row (tm is 16-aligned)
    out_row_bytes = np_ * 4                # f32 output row
    acc_row_bytes = np_ * 4                # f32 dot-result temporary
    per_row = 2 * (in_row_bytes + out_row_bytes) + acc_row_bytes   # double-buffered I/O
    fixed = (2 * _round_up(Kg, 16) * np_ * 2      # weight (double-buffered)
             + 2 * 8 * np_ * 4                    # bias tile
             + 2 * 1024 * 1024)                   # slack / internal scratch

    tm = _pick_block_rows(Mg, per_row, fixed, budget)
    grid = (pl.cdiv(Mg, tm),)

    out = pl.pallas_call(
        functools.partial(_down_conv_kernel, apply_relu=relu),
        out_shape=jax.ShapeDtypeStruct((Mg, Ng), jnp.float32),
        grid_spec=pltpu.PrefetchScalarGridSpec(
            num_scalar_prefetch=0,
            grid=grid,
            in_specs=[
                pl.BlockSpec((tm, Kg), lambda i: (i, 0)),
                pl.BlockSpec((Kg, Ng), lambda i: (0, 0)),
                pl.BlockSpec((1, Ng), lambda i: (0, 0)),
            ],
            out_specs=pl.BlockSpec((tm, Ng), lambda i: (i, 0)),
        ),
        compiler_params=pltpu.CompilerParams(
            dimension_semantics=("parallel",),
            vmem_limit_bytes=int(vmem_limit),
            allow_input_fusion=[True, False, False],
        ),
    )(xv, wv, bv)

    # Free reshapes on the (8x downsampled) output + one cheap NCDHW transpose.
    out = out.reshape(B, Do, Ho, Wo, Cout)
    return jnp.transpose(out, (0, 4, 1, 2, 3))


# ----------------------------------------------------------------------------
if __name__ == "__main__":
    key = jax.random.PRNGKey(0)
    B, Cin, Cout, stride = 2, 16, 32, 2
    D = H = W = 16

    k_x, k_w, k_b = jax.random.split(key, 3)
    x = jax.random.normal(k_x, (B, Cin, D, H, W), jnp.float32)
    fan_in = Cin * stride ** 3
    weight = jax.random.normal(k_w, (Cout, Cin, stride, stride, stride),
                               jnp.float32) / jnp.sqrt(fan_in)
    bias = 0.01 * jax.random.normal(k_b, (Cout,), jnp.float32)

    fwd = jax.jit(functools.partial(downsampling_conv_block, stride=stride))
    out = jax.block_until_ready(fwd(x, weight, bias))

    expected = (B, Cout, D // stride, H // stride, W // stride)
    assert out.shape == expected, (out.shape, expected)
    assert bool(jnp.all(jnp.isfinite(out)))

    # Reference check (true f32 conv); bf16 MXU operands => loose tolerance.
    ref = lax.conv_general_dilated(
        x, weight, window_strides=(stride,) * 3, padding="VALID",
        dimension_numbers=("NCDHW", "OIDHW", "NCDHW"),
        precision=lax.Precision.HIGHEST)
    ref = jnp.maximum(ref + bias.reshape(1, -1, 1, 1, 1), 0.0)
    max_err = float(jnp.max(jnp.abs(out - ref)))
    assert max_err < 7e-2, max_err

    print("KERNEL_OK")
</pallas_src>

<mosaic_0001>
module attributes {stable_mosaic.version = 11 : i64} {
  func.func @_down_conv_kernel(%arg0: i32, %arg1: memref<64x512xbf16, #tpu.memory_space<vmem>>, %arg2: memref<512x128xbf16, #tpu.memory_space<vmem>>, %arg3: memref<1x128xf32, #tpu.memory_space<vmem>>, %arg4: memref<64x128xf32, #tpu.memory_space<vmem>>) attributes {dimension_semantics = [#tpu.dimension_semantics<parallel>], iteration_bounds = array<i64: 4>, scalar_prefetch = 0 : i64, scratch_operands = 0 : i64, tpu.core_type = #tpu.core_type<tc>, window_params = [{transform_indices = @transform_0, window_bounds = array<i64: 64, 512>}, {pipeline_mode = #tpu.pipeline_mode<synchronous>, transform_indices = @transform_1, window_bounds = array<i64: 512, 128>}, {pipeline_mode = #tpu.pipeline_mode<synchronous>, transform_indices = @transform_2, window_bounds = array<i64: 1, 128>}, {transform_indices = @transform_3, window_bounds = array<i64: 64, 128>}]} {
    %c0 = arith.constant 0 : index
    %c0_0 = arith.constant 0 : index
    %0 = vector.load %arg1[%c0, %c0_0] : memref<64x512xbf16, #tpu.memory_space<vmem>>, vector<64x512xbf16>
    %c0_1 = arith.constant 0 : index
    %c0_2 = arith.constant 0 : index
    %1 = vector.load %arg2[%c0_1, %c0_2] : memref<512x128xbf16, #tpu.memory_space<vmem>>, vector<512x128xbf16>
    %cst = arith.constant dense<0.000000e+00> : vector<64x128xf32>
    %2 = tpu.matmul %0, %1, %cst {dimension_numbers = #tpu.dot_dimension_numbers<[1], [0], [0], [1], [0, 0, 1, 1], [], []>} : vector<64x512xbf16>, vector<512x128xbf16>, vector<64x128xf32> -> vector<64x128xf32>
    %c0_3 = arith.constant 0 : index
    %c0_4 = arith.constant 0 : index
    %3 = vector.load %arg3[%c0_3, %c0_4] : memref<1x128xf32, #tpu.memory_space<vmem>>, vector<1x128xf32>
    %4 = vector.broadcast %3 : vector<1x128xf32> to vector<64x128xf32>
    %5 = arith.addf %2, %4 : vector<64x128xf32>
    %cst_5 = arith.constant 0.000000e+00 : f32
    %6 = vector.broadcast %cst_5 : f32 to vector<64x128xf32>
    %7 = arith.maximumf %5, %6 : vector<64x128xf32>
    %c0_6 = arith.constant 0 : index
    %c0_7 = arith.constant 0 : index
    %8 = vector.load %arg4[%c0_6, %c0_7] : memref<64x128xf32, #tpu.memory_space<vmem>>, vector<64x128xf32>
    tpu.vector_store %arg4[%c0_6, %c0_7], %7 {strides = array<i32>} : memref<64x128xf32, #tpu.memory_space<vmem>>, vector<64x128xf32>,
    return
  }
  func.func @transform_0(%arg0: i32) -> (i32, i32) {
    %c0_i32 = arith.constant 0 : i32
    %c0_i32_0 = arith.constant 0 : i32
    return %arg0, %c0_i32 : i32, i32
  }
  func.func @transform_1(%arg0: i32) -> (i32, i32) {
    %c0_i32 = arith.constant 0 : i32
    %c0_i32_0 = arith.constant 0 : i32
    %c0_i32_1 = arith.constant 0 : i32
    return %c0_i32, %c0_i32_0 : i32, i32
  }
  func.func @transform_2(%arg0: i32) -> (i32, i32) {
    %c0_i32 = arith.constant 0 : i32
    %c0_i32_0 = arith.constant 0 : i32
    %c0_i32_1 = arith.constant 0 : i32
    return %c0_i32, %c0_i32_0 : i32, i32
  }
  func.func @transform_3(%arg0: i32) -> (i32, i32) {
    %c0_i32 = arith.constant 0 : i32
    %c0_i32_0 = arith.constant 0 : i32
    return %arg0, %c0_i32 : i32, i32
  }
}

</mosaic_0001>

<llo_original>
// kernel: downsampling_conv_block.1
$region0: #{downsampling_conv_block.1}
  #allocation0 [shape = 'u32[]', space=smem, size = 0x4, offset = 0x4, fixed_abs, tag = 'smem constant byte address 0x4 - core index']
  #allocation1 [shape = 'u32[144,128]{1,0:T(1,128)}', space=vmem, size = 0x12000, scoped, tag = 'internal scratch']
  %s0 = inlined_call_operand.vmem [shape: bf16[256,512], index: 0, kind: input, shape index: {}]
  %s1 = inlined_call_operand.vmem [shape: bf16[512,128], index: 1, kind: input, shape index: {}]
  %s2 = inlined_call_operand.vmem [shape: f32[1,128], index: 2, kind: input, shape index: {}]
  %s3 = inlined_call_operand.vmem [shape: f32[256,128], index: 3, kind: output, shape index: {}]
  %s4 = sld [smem:[#allocation0]]
  $region45: #{downsampling_conv_block.1} parent=0
    _
  %s6 = ssub.s32 1, %s4
  %s7 = scalar_select 0, %s6, %s4
  loop: start=0, step=1, limit=6
  $region2: #{downsampling_conv_block.1} parent=0 // loop_pre_header
    _
  $region3: #{downsampling_conv_block.1} parent=0 // loop_header
    %s9 = sphi 0, %s13
    %p10 = scmp.ge.s32.totalorder %s9, 6
    %s19 = sphi 0, %s21
    %s22 = sphi 0, %s19
    %s23 = sphi 0, %s22
    %s39 = sphi 0, %s23
    %s43 = sphi 0, %s43
    %s45 = sphi 0, %s43
    %s46 = sphi 0, %s45
    %s60 = sphi 0, %s46
    %s64 = sphi 0, %s64
    %s66 = sphi 0, %s64
    %s67 = sphi 0, %s66
    %s81 = sphi 0, %s67
    %s87 = sphi 0, %s89
    %s90 = sphi 0, %s87
    %s91 = sphi 0, %s90
    %s107 = sphi 0, %s91
  $region4: #{downsampling_conv_block.1} parent=0 // loop_header_branch
    %12 = sbr.rel (%p10) target = $region8
  $region5: #{downsampling_conv_block.1} parent=0 // loop_body
    %s14 = ssub.s32 %s9, 1
    %s15 = ssub.s32 %s9, 2
    %s16 = sadd.s32 %s9, 1
    %s17 = ssub.s32 %s9, %s16
    %p18 = scmp.eq.s32.totalorder %s17, 0
    %s20 = sadd.s32 %s19, 1
    %s21 = scalar_select %p18, %s19, %s20
    %p24 = pneg %p18
    %p25 = scmp.eq.s32.totalorder %s9, 3
    %p26 = por %p24, %p25
    %p27 = scmp.ne.s32.totalorder %s19, %s22
    %p28 = scmp.eq.s32.totalorder %s9, 0
    %p29 = por %p27, %p28
    %p30 = scmp.ne.s32.totalorder %s19, %s22
    %p31 = scmp.eq.s32.totalorder %s14, 3
    %p32 = por %p30, %p31
    %p33 = scmp.ne.s32.totalorder %s22, %s23
    %p34 = scmp.eq.s32.totalorder %s14, 0
    %p35 = por %p33, %p34
    %p36 = scmp.ne.s32.totalorder %s22, %s23
    %p37 = scmp.eq.s32.totalorder %s15, 3
    %p38 = por %p36, %p37
    %p40 = scmp.ne.s32.totalorder %s23, %s39
    %p41 = scmp.eq.s32.totalorder %s15, 0
    %p42 = por %p40, %p41
    %s44 = sadd.s32 %s43, 1
    %p47 = scmp.eq.s32.totalorder %s9, 3
    %p48 = scmp.ne.s32.totalorder %s43, %s45
    %p49 = scmp.eq.s32.totalorder %s9, 0
    %p50 = por %p48, %p49
    %p51 = scmp.ne.s32.totalorder %s43, %s45
    %p52 = scmp.eq.s32.totalorder %s14, 3
    %p53 = por %p51, %p52
    %p54 = scmp.ne.s32.totalorder %s45, %s46
    %p55 = scmp.eq.s32.totalorder %s14, 0
    %p56 = por %p54, %p55
    %p57 = scmp.ne.s32.totalorder %s45, %s46
    %p58 = scmp.eq.s32.totalorder %s15, 3
    %p59 = por %p57, %p58
    %p61 = scmp.ne.s32.totalorder %s46, %s60
    %p62 = scmp.eq.s32.totalorder %s15, 0
    %p63 = por %p61, %p62
    %s65 = sadd.s32 %s64, 1
    %p68 = scmp.eq.s32.totalorder %s9, 3
    %p69 = scmp.ne.s32.totalorder %s64, %s66
    %p70 = scmp.eq.s32.totalorder %s9, 0
    %p71 = por %p69, %p70
    %p72 = scmp.ne.s32.totalorder %s64, %s66
    %p73 = scmp.eq.s32.totalorder %s14, 3
    %p74 = por %p72, %p73
    %p75 = scmp.ne.s32.totalorder %s66, %s67
    %p76 = scmp.eq.s32.totalorder %s14, 0
    %p77 = por %p75, %p76
    %p78 = scmp.ne.s32.totalorder %s66, %s67
    %p79 = scmp.eq.s32.totalorder %s15, 3
    %p80 = por %p78, %p79
    %p82 = scmp.ne.s32.totalorder %s67, %s81
    %p83 = scmp.eq.s32.totalorder %s15, 0
    %p84 = por %p82, %p83
    %s85 = ssub.s32 %s9, %s16
    %p86 = scmp.eq.s32.totalorder %s85, 0
    %s88 = sadd.s32 %s87, 1
    %s89 = scalar_select %p86, %s87, %s88
    %p92 = pneg %p86
    %p93 = scmp.eq.s32.totalorder %s9, 3
    %p94 = por %p92, %p93
    %p95 = scmp.ne.s32.totalorder %s87, %s90
    %p96 = scmp.eq.s32.totalorder %s9, 0
    %p97 = por %p95, %p96
    %p98 = scmp.ne.s32.totalorder %s87, %s90
    %p99 = scmp.eq.s32.totalorder %s14, 3
    %p100 = por %p98, %p99
    %p101 = scmp.ne.s32.totalorder %s90, %s91
    %p102 = scmp.eq.s32.totalorder %s14, 0
    %p103 = por %p101, %p102
    %p104 = scmp.ne.s32.totalorder %s90, %s91
    %p105 = scmp.eq.s32.totalorder %s15, 3
    %p106 = por %p104, %p105
    %p108 = scmp.ne.s32.totalorder %s91, %s107
    %p109 = scmp.eq.s32.totalorder %s15, 0
    %p110 = por %p108, %p109
    %p111 = scmp.le.s32.totalorder 1, %s9
    %p112 = scmp.lt.s32.totalorder %s9, 5
    %p113 = pnand %p111, %p112
    %p114 = pneg %p113
    // Predicated region
    $region9: #{downsampling_conv_block.1} parent=5 // pred_check
      _
    $region10: #{downsampling_conv_block.1} parent=5 // pred_check_branch
      %116 = sbr.rel (%p113) target = $region12
    $region11: #{downsampling_conv_block.1} parent=5 // pred_region
      %s117 = ssub.s32 %s9, 1
      // Predicated region
      $region13: #{downsampling_conv_block.1} parent=11 // pred_check
        %p118 = pneg %p56
      $region14: #{downsampling_conv_block.1} parent=11 // pred_check_branch
        %120 = sbr.rel (%p118) target = $region16
      $region15: #{downsampling_conv_block.1} parent=11 // pred_region
        _
      $region16: #{downsampling_conv_block.1} parent=11 // pred_fallthru
        _
      // Predicated region
      $region17: #{downsampling_conv_block.1} parent=11 // pred_check
        %p121 = pneg %p77
      $region18: #{downsampling_conv_block.1} parent=11 // pred_check_branch
        %123 = sbr.rel (%p121) target = $region20
      $region19: #{downsampling_conv_block.1} parent=11 // pred_region
        _
      $region20: #{downsampling_conv_block.1} parent=11 // pred_fallthru
        _
    $region12: #{downsampling_conv_block.1} parent=5 // pred_fallthru
      _
    %p124 = scmp.lt.s32.totalorder %s9, 4
    // Predicated region
    $region21: #{downsampling_conv_block.1} parent=5 // pred_check
      %p125 = pneg %p124
    $region22: #{downsampling_conv_block.1} parent=5 // pred_check_branch
      %127 = sbr.rel (%p125) target = $region24
    $region23: #{downsampling_conv_block.1} parent=5 // pred_region
      // Predicated region
      $region25: #{downsampling_conv_block.1} parent=23 // pred_check
        %p128 = pneg %p29
      $region26: #{downsampling_conv_block.1} parent=23 // pred_check_branch
        %130 = sbr.rel (%p128) target = $region28
      $region27: #{downsampling_conv_block.1} parent=23 // pred_region
        %s131 = smul.u32 8, %s9
        %p132 = scmp.lt.s32.totalorder %s131, 31
        %s133 = scalar_select %p132, %s131, 31
        %s134 = smul.addr %s133, 4
        %s135 = smul.addr %s134, 4
        %s136 = scalar_lea.vmem %s0, %s135
        %s137 = smul.u32 8, %s9
      $region28: #{downsampling_conv_block.1} parent=23 // pred_fallthru
        _
    $region24: #{downsampling_conv_block.1} parent=5 // pred_fallthru
      _
    %p138 = scmp.le.s32.totalorder 1, %s9
    %p139 = scmp.lt.s32.totalorder %s9, 5
    %p140 = pnand %p138, %p139
    %p141 = pneg %p140
    // Predicated region
    $region29: #{downsampling_conv_block.1} parent=5 // pred_check
      _
    $region30: #{downsampling_conv_block.1} parent=5 // pred_check_branch
      %143 = sbr.rel (%p140) target = $region32
    $region31: #{downsampling_conv_block.1} parent=5 // pred_region
      %s144 = ssub.s32 %s9, 1
      %s145 = smul.u32 8, %s14
      %p146 = scmp.lt.s32.totalorder %s145, 31
      %s147 = scalar_select %p146, %s145, 31
      %s148 = smul.addr %s147, 4
      %s149 = smul.addr %s148, 4
      %s150 = scalar_lea.vmem %s0, %s149
      %p151 = pneg %p35
      %p152 = pneg %p32
      %p153 = pneg %p56
      %p154 = pneg %p53
      %p155 = pneg %p77
      %p156 = pneg %p74
      %p157 = pneg %p103
      %p158 = pneg %p100
      %s159 = smul.u32 8, %s14
      %p160 = scmp.lt.s32.totalorder %s159, 31
      %s161 = scalar_select %p160, %s159, 31
      %s162 = smul.addr %s161, 8
      %s163 = scalar_lea.vmem %s3, %s162
      %s164 = smul.u32 8, %s14
      %p165 = scmp.lt.s32.totalorder %s164, 31
      %s166 = scalar_select %p165, %s164, 31
      %s167 = smul.addr %s166, 4
      %s168 = smul.addr %s167, 4
      %s169 = scalar_lea.vmem %s0, %s168
      %s170 = smul.u32 8, %s14
      %s171 = smul.u32 8, %s14
      %p172 = scmp.lt.s32.totalorder %s171, 31
      %s173 = scalar_select %p172, %s171, 31
      %s174 = smul.addr %s173, 8
      %s175 = scalar_lea.vmem %s3, %s174
      %s176 = smul.u32 8, %s14
      %v178 = vld [vmem:[%s169] sm:$0xff]
      %v179 = vld [vmem:[%s169 + $0x8] sm:$0xff]
      %v180 = vld [vmem:[%s169 + $0x10] sm:$0xff]
      %v181 = vld [vmem:[%s169 + $0x18] sm:$0xff]
      %v182 = vld [vmem:[%s169 + $0x20] sm:$0xff]
      %v183 = vld [vmem:[%s169 + $0x28] sm:$0xff]
      %v184 = vld [vmem:[%s169 + $0x30] sm:$0xff]
      %v185 = vld [vmem:[%s169 + $0x38] sm:$0xff]
      %v186 = vld [vmem:[%s169 + $0x40] sm:$0xff]
      %v187 = vld [vmem:[%s169 + $0x48] sm:$0xff]
      %v188 = vld [vmem:[%s169 + $0x50] sm:$0xff]
      %v189 = vld [vmem:[%s169 + $0x58] sm:$0xff]
      %v190 = vld [vmem:[%s169 + $0x60] sm:$0xff]
      %v191 = vld [vmem:[%s169 + $0x68] sm:$0xff]
      %v192 = vld [vmem:[%s169 + $0x70] sm:$0xff]
      %v193 = vld [vmem:[%s169 + $0x78] sm:$0xff]
      %v194 = vld [vmem:[%s1] sm:$0xf]
      %v195 = vld [vmem:[%s1 + $0x4] sm:$0xf]
      %v196 = vld [vmem:[%s1 + $0x8] sm:$0xf]
      %v197 = vld [vmem:[%s1 + $0xc] sm:$0xf]
      %v198 = vld [vmem:[%s1 + $0x10] sm:$0xf]
      %v199 = vld [vmem:[%s1 + $0x14] sm:$0xf]
      %v200 = vld [vmem:[%s1 + $0x18] sm:$0xf]
      %v201 = vld [vmem:[%s1 + $0x1c] sm:$0xf]
      %v202 = vld [vmem:[%s1 + $0x20] sm:$0xf]
      %v203 = vld [vmem:[%s1 + $0x24] sm:$0xf]
      %v204 = vld [vmem:[%s1 + $0x28] sm:$0xf]
      %v205 = vld [vmem:[%s1 + $0x2c] sm:$0xf]
      %v206 = vld [vmem:[%s1 + $0x30] sm:$0xf]
      %v207 = vld [vmem:[%s1 + $0x34] sm:$0xf]
      %v208 = vld [vmem:[%s1 + $0x38] sm:$0xf]
      %v209 = vld [vmem:[%s1 + $0x3c] sm:$0xf]
      %v210 = vld [vmem:[%s1 + $0x40] sm:$0xf]
      %v211 = vld [vmem:[%s1 + $0x44] sm:$0xf]
      %v212 = vld [vmem:[%s1 + $0x48] sm:$0xf]
      %v213 = vld [vmem:[%s1 + $0x4c] sm:$0xf]
      %v214 = vld [vmem:[%s1 + $0x50] sm:$0xf]
      %v215 = vld [vmem:[%s1 + $0x54] sm:$0xf]
      %v216 = vld [vmem:[%s1 + $0x58] sm:$0xf]
      %v217 = vld [vmem:[%s1 + $0x5c] sm:$0xf]
      %v218 = vld [vmem:[%s1 + $0x60] sm:$0xf]
      %v219 = vld [vmem:[%s1 + $0x64] sm:$0xf]
      %v220 = vld [vmem:[%s1 + $0x68] sm:$0xf]
      %v221 = vld [vmem:[%s1 + $0x6c] sm:$0xf]
      %v222 = vld [vmem:[%s1 + $0x70] sm:$0xf]
      %v223 = vld [vmem:[%s1 + $0x74] sm:$0xf]
      %v224 = vld [vmem:[%s1 + $0x78] sm:$0xf]
      %v225 = vld [vmem:[%s1 + $0x7c] sm:$0xf]
      %v226 = vld [vmem:[%s1 + $0x80] sm:$0xf]
      %v227 = vld [vmem:[%s1 + $0x84] sm:$0xf]
      %v228 = vld [vmem:[%s1 + $0x88] sm:$0xf]
      %v229 = vld [vmem:[%s1 + $0x8c] sm:$0xf]
      %v230 = vld [vmem:[%s1 + $0x90] sm:$0xf]
      %v231 = vld [vmem:[%s1 + $0x94] sm:$0xf]
      %v232 = vld [vmem:[%s1 + $0x98] sm:$0xf]
      %v233 = vld [vmem:[%s1 + $0x9c] sm:$0xf]
      %v234 = vld [vmem:[%s1 + $0xa0] sm:$0xf]
      %v235 = vld [vmem:[%s1 + $0xa4] sm:$0xf]
      %v236 = vld [vmem:[%s1 + $0xa8] sm:$0xf]
      %v237 = vld [vmem:[%s1 + $0xac] sm:$0xf]
      %v238 = vld [vmem:[%s1 + $0xb0] sm:$0xf]
      %v239 = vld [vmem:[%s1 + $0xb4] sm:$0xf]
      %v240 = vld [vmem:[%s1 + $0xb8] sm:$0xf]
      %v241 = vld [vmem:[%s1 + $0xbc] sm:$0xf]
      %v242 = vld [vmem:[%s1 + $0xc0] sm:$0xf]
      %v243 = vld [vmem:[%s1 + $0xc4] sm:$0xf]
      %v244 = vld [vmem:[%s1 + $0xc8] sm:$0xf]
      %v245 = vld [vmem:[%s1 + $0xcc] sm:$0xf]
      %v246 = vld [vmem:[%s1 + $0xd0] sm:$0xf]
      %v247 = vld [vmem:[%s1 + $0xd4] sm:$0xf]
      %v248 = vld [vmem:[%s1 + $0xd8] sm:$0xf]
      %v249 = vld [vmem:[%s1 + $0xdc] sm:$0xf]
      %v250 = vld [vmem:[%s1 + $0xe0] sm:$0xf]
      %v251 = vld [vmem:[%s1 + $0xe4] sm:$0xf]
      %v252 = vld [vmem:[%s1 + $0xe8] sm:$0xf]
      %v253 = vld [vmem:[%s1 + $0xec] sm:$0xf]
      %v254 = vld [vmem:[%s1 + $0xf0] sm:$0xf]
      %v255 = vld [vmem:[%s1 + $0xf4] sm:$0xf]
      %v256 = vld [vmem:[%s1 + $0xf8] sm:$0xf]
      %v257 = vld [vmem:[%s1 + $0xfc] sm:$0xf]
      %v258 = vld [vmem:[%s2] sm:$0x1]
      %v260 = vlaneseq
      %v261 = vshrl.u32 %v260, 7
      %v262 = vsub.s32 0, %v261
      %v263 = vrot.slane %v258, %v262
      %v281 = vunpack.c.l.b16 %v178
      %v282 = vunpack.c.h.b16 %v178
      %v283 = vunpack.c.l.b16 %v179
      %v284 = vunpack.c.h.b16 %v179
      %v285 = vunpack.c.l.b16 %v180
      %v286 = vunpack.c.h.b16 %v180
      %v287 = vunpack.c.l.b16 %v181
      %v288 = vunpack.c.h.b16 %v181
      %v289 = vunpack.c.l.b16 %v182
      %v290 = vunpack.c.h.b16 %v182
      %v291 = vunpack.c.l.b16 %v183
      %v292 = vunpack.c.h.b16 %v183
      %v293 = vunpack.c.l.b16 %v184
      %v294 = vunpack.c.h.b16 %v184
      %v295 = vunpack.c.l.b16 %v185
      %v296 = vunpack.c.h.b16 %v185
      %v297 = vunpack.c.l.b16 %v186
      %v298 = vunpack.c.h.b16 %v186
      %v299 = vunpack.c.l.b16 %v187
      %v300 = vunpack.c.h.b16 %v187
      %v301 = vunpack.c.l.b16 %v188
      %v302 = vunpack.c.h.b16 %v188
      %v303 = vunpack.c.l.b16 %v189
      %v304 = vunpack.c.h.b16 %v189
      %v305 = vunpack.c.l.b16 %v190
      %v306 = vunpack.c.h.b16 %v190
      %v307 = vunpack.c.l.b16 %v191
      %v308 = vunpack.c.h.b16 %v191
      %v309 = vunpack.c.l.b16 %v192
      %v310 = vunpack.c.h.b16 %v192
      %v311 = vunpack.c.l.b16 %v193
      %v312 = vunpack.c.h.b16 %v193
      %v313 = vpack.c.b16 %v285, %v281
      %v314 = vpack.c.b16 %v286, %v282
      %v315 = vpack.c.b16 %v287, %v283
      %v316 = vpack.c.b16 %v288, %v284
      %v317 = vpack.c.b16 %v293, %v289
      %v318 = vpack.c.b16 %v294, %v290
      %v319 = vpack.c.b16 %v295, %v291
      %v320 = vpack.c.b16 %v296, %v292
      %v321 = vpack.c.b16 %v301, %v297
      %v322 = vpack.c.b16 %v302, %v298
      %v323 = vpack.c.b16 %v303, %v299
      %v324 = vpack.c.b16 %v304, %v300
      %v325 = vpack.c.b16 %v309, %v305
      %v326 = vpack.c.b16 %v310, %v306
      %v327 = vpack.c.b16 %v311, %v307
      %v328 = vpack.c.b16 %v312, %v308
      %v409 = vunpack.c.l.b16 %v194
      %v410 = vunpack.c.l.b16 %v195
      %v411 = vunpack.c.l.b16 %v196
      %v412 = vunpack.c.l.b16 %v197
      %v413 = vunpack.c.l.b16 %v198
      %v414 = vunpack.c.l.b16 %v199
      %v415 = vunpack.c.l.b16 %v200
      %v416 = vunpack.c.l.b16 %v201
      %v417 = vunpack.c.l.b16 %v202
      %v418 = vunpack.c.l.b16 %v203
      %v419 = vunpack.c.l.b16 %v204
      %v420 = vunpack.c.l.b16 %v205
      %v421 = vunpack.c.l.b16 %v206
      %v422 = vunpack.c.l.b16 %v207
      %v423 = vunpack.c.l.b16 %v208
      %v424 = vunpack.c.l.b16 %v209
      %v425 = vunpack.c.l.b16 %v210
      %v426 = vunpack.c.l.b16 %v211
      %v427 = vunpack.c.l.b16 %v212
      %v428 = vunpack.c.l.b16 %v213
      %v429 = vunpack.c.l.b16 %v214
      %v430 = vunpack.c.l.b16 %v215
      %v431 = vunpack.c.l.b16 %v216
      %v432 = vunpack.c.l.b16 %v217
      %v433 = vunpack.c.l.b16 %v218
      %v434 = vunpack.c.l.b16 %v219
      %v435 = vunpack.c.l.b16 %v220
      %v436 = vunpack.c.l.b16 %v221
      %v437 = vunpack.c.l.b16 %v222
      %v438 = vunpack.c.l.b16 %v223
      %v439 = vunpack.c.l.b16 %v224
      %v440 = vunpack.c.l.b16 %v225
      %v441 = vunpack.c.l.b16 %v226
      %v442 = vunpack.c.l.b16 %v227
      %v443 = vunpack.c.l.b16 %v228
      %v444 = vunpack.c.l.b16 %v229
      %v445 = vunpack.c.l.b16 %v230
      %v446 = vunpack.c.l.b16 %v231
      %v447 = vunpack.c.l.b16 %v232
      %v448 = vunpack.c.l.b16 %v233
      %v449 = vunpack.c.l.b16 %v234
      %v450 = vunpack.c.l.b16 %v235
      %v451 = vunpack.c.l.b16 %v236
      %v452 = vunpack.c.l.b16 %v237
      %v453 = vunpack.c.l.b16 %v238
      %v454 = vunpack.c.l.b16 %v239
      %v455 = vunpack.c.l.b16 %v240
      %v456 = vunpack.c.l.b16 %v241
      %v457 = vunpack.c.l.b16 %v242
      %v458 = vunpack.c.l.b16 %v243
      %v459 = vunpack.c.l.b16 %v244
      %v460 = vunpack.c.l.b16 %v245
      %v461 = vunpack.c.l.b16 %v246
      %v462 = vunpack.c.l.b16 %v247
      %v463 = vunpack.c.l.b16 %v248
      %v464 = vunpack.c.l.b16 %v249
      %v465 = vunpack.c.l.b16 %v250
      %v466 = vunpack.c.l.b16 %v251
      %v467 = vunpack.c.l.b16 %v252
      %v468 = vunpack.c.l.b16 %v253
      %v469 = vunpack.c.l.b16 %v254
      %v470 = vunpack.c.l.b16 %v255
      %v471 = vunpack.c.l.b16 %v256
      %v472 = vunpack.c.l.b16 %v257
      %v473 = vpack.c.b16 %v410, %v409
      %v474 = vpack.c.b16 %v412, %v411
      %v475 = vpack.c.b16 %v414, %v413
      %v476 = vpack.c.b16 %v416, %v415
      %v477 = vpack.c.b16 %v418, %v417
      %v478 = vpack.c.b16 %v420, %v419
      %v479 = vpack.c.b16 %v422, %v421
      %v480 = vpack.c.b16 %v424, %v423
      %v481 = vpack.c.b16 %v426, %v425
      %v482 = vpack.c.b16 %v428, %v427
      %v483 = vpack.c.b16 %v430, %v429
      %v484 = vpack.c.b16 %v432, %v431
      %v485 = vpack.c.b16 %v434, %v433
      %v486 = vpack.c.b16 %v436, %v435
      %v487 = vpack.c.b16 %v438, %v437
      %v488 = vpack.c.b16 %v440, %v439
      %v489 = vpack.c.b16 %v442, %v441
      %v490 = vpack.c.b16 %v444, %v443
      %v491 = vpack.c.b16 %v446, %v445
      %v492 = vpack.c.b16 %v448, %v447
      %v493 = vpack.c.b16 %v450, %v449
      %v494 = vpack.c.b16 %v452, %v451
      %v495 = vpack.c.b16 %v454, %v453
      %v496 = vpack.c.b16 %v456, %v455
      %v497 = vpack.c.b16 %v458, %v457
      %v498 = vpack.c.b16 %v460, %v459
      %v499 = vpack.c.b16 %v462, %v461
      %v500 = vpack.c.b16 %v464, %v463
      %v501 = vpack.c.b16 %v466, %v465
      %v502 = vpack.c.b16 %v468, %v467
      %v503 = vpack.c.b16 %v470, %v469
      %v504 = vpack.c.b16 %v472, %v471
      %537 = vmatprep.subr.bf16.mxu0 0
      %538 = vmatpush1.bf16.msra.mxu0 %v473
      %539 = vmatprep.subr.bf16.mxu0 0
      %540 = vmatpush1.bf16.msra.mxu0 %v474
      %541 = vmatprep.subr.bf16.mxu0 0
      %542 = vmatpush1.bf16.msra.mxu0 %v475
      %543 = vmatprep.subr.bf16.mxu0 0
      %544 = vmatpush1.bf16.msra.mxu0 %v476
      %545 = vmatprep.subr.bf16.mxu0 0
      %546 = vmatpush1.bf16.msra.mxu0 %v477
      %547 = vmatprep.subr.bf16.mxu0 0
      %548 = vmatpush1.bf16.msra.mxu0 %v478
      %549 = vmatprep.subr.bf16.mxu0 0
      %550 = vmatpush1.bf16.msra.mxu0 %v479
      %551 = vmatprep.subr.bf16.mxu0 0
      %552 = vmatpush1.bf16.msra.mxu0 %v480
      %553 = vmatprep.subr.bf16.mxu0 0
      %554 = vmatpush1.bf16.msra.mxu0 %v481
      %555 = vmatprep.subr.bf16.mxu0 0
      %556 = vmatpush1.bf16.msra.mxu0 %v482
      %557 = vmatprep.subr.bf16.mxu0 0
      %558 = vmatpush1.bf16.msra.mxu0 %v483
      %559 = vmatprep.subr.bf16.mxu0 0
      %560 = vmatpush1.bf16.msra.mxu0 %v484
      %561 = vmatprep.subr.bf16.mxu0 0
      %562 = vmatpush1.bf16.msra.mxu0 %v485
      %563 = vmatprep.subr.bf16.mxu0 0
      %564 = vmatpush1.bf16.msra.mxu0 %v486
      %565 = vmatprep.subr.bf16.mxu0 0
      %566 = vmatpush1.bf16.msra.mxu0 %v487
      %567 = vmatprep.subr.bf16.mxu0 0
      %568 = vmatpush1.bf16.msra.mxu0 %v488
      %569 = vmatprep.mubr.bf16.mxu0 %v314
      %570 = vmatmul.mubr.bf16.gmra.mrb[0].mxu0 %v313
      %v571 = vpop.f32.mrb[0].mxu0
      %v572 = vadd.f32 %v263, %v571
      %v573 = vpop.f32.mrb[0].mxu0
      %v574 = vpop.f32.mrb[0].mxu0
      %v575 = vadd.f32 %v263, %v574
      %v576 = vpop.f32.mrb[0].mxu0
      %577 = vmatprep.mubr.bf16.mxu0 %v318
      %578 = vmatmul.mubr.bf16.gmra.mrb[0].mxu0 %v317
      %v579 = vpop.f32.mrb[0].mxu0
      %v580 = vadd.f32 %v263, %v579
      %v581 = vpop.f32.mrb[0].mxu0
      %v582 = vpop.f32.mrb[0].mxu0
      %v583 = vadd.f32 %v263, %v582
      %v584 = vpop.f32.mrb[0].mxu0
      %585 = vmatprep.mubr.bf16.mxu0 %v322
      %586 = vmatmul.mubr.bf16.gmra.mrb[0].mxu0 %v321
      %v587 = vpop.f32.mrb[0].mxu0
      %v588 = vadd.f32 %v263, %v587
      %v589 = vpop.f32.mrb[0].mxu0
      %v590 = vpop.f32.mrb[0].mxu0
      %v591 = vadd.f32 %v263, %v590
      %v592 = vpop.f32.mrb[0].mxu0
      %593 = vmatprep.mubr.bf16.mxu0 %v326
      %594 = vmatmul.mubr.bf16.gmra.mrb[0].mxu0 %v325
      %v595 = vpop.f32.mrb[0].mxu0
      %v596 = vadd.f32 %v263, %v595
      %v597 = vpop.f32.mrb[0].mxu0
      %v598 = vpop.f32.mrb[0].mxu0
      %v599 = vadd.f32 %v263, %v598
      %v600 = vpop.f32.mrb[0].mxu0
      %601 = vdwg.mxu0
      %602 = vmatprep.subr.bf16.mxu0 0
      %603 = vmatpush1.bf16.msra.mxu0 %v489
      %604 = vmatprep.subr.bf16.mxu0 0
      %605 = vmatpush1.bf16.msra.mxu0 %v490
      %606 = vmatprep.subr.bf16.mxu0 0
      %607 = vmatpush1.bf16.msra.mxu0 %v491
      %608 = vmatprep.subr.bf16.mxu0 0
      %609 = vmatpush1.bf16.msra.mxu0 %v492
      %610 = vmatprep.subr.bf16.mxu0 0
      %611 = vmatpush1.bf16.msra.mxu0 %v493
      %612 = vmatprep.subr.bf16.mxu0 0
      %613 = vmatpush1.bf16.msra.mxu0 %v494
      %614 = vmatprep.subr.bf16.mxu0 0
      %615 = vmatpush1.bf16.msra.mxu0 %v495
      %616 = vmatprep.subr.bf16.mxu0 0
      %617 = vmatpush1.bf16.msra.mxu0 %v496
      %618 = vmatprep.subr.bf16.mxu0 0
      %619 = vmatpush1.bf16.msra.mxu0 %v497
      %620 = vmatprep.subr.bf16.mxu0 0
      %621 = vmatpush1.bf16.msra.mxu0 %v498
      %622 = vmatprep.subr.bf16.mxu0 0
      %623 = vmatpush1.bf16.msra.mxu0 %v499
      %624 = vmatprep.subr.bf16.mxu0 0
      %625 = vmatpush1.bf16.msra.mxu0 %v500
      %626 = vmatprep.subr.bf16.mxu0 0
      %627 = vmatpush1.bf16.msra.mxu0 %v501
      %628 = vmatprep.subr.bf16.mxu0 0
      %629 = vmatpush1.bf16.msra.mxu0 %v502
      %630 = vmatprep.subr.bf16.mxu0 0
      %631 = vmatpush1.bf16.msra.mxu0 %v503
      %632 = vmatprep.subr.bf16.mxu0 0
      %633 = vmatpush1.bf16.msra.mxu0 %v504
      %634 = vmatprep.mubr.bf16.mxu0 %v316
      %635 = vmatmul.mubr.bf16.gmra.mrb[0].mxu0 %v315
      %v636 = vpop.f32.mrb[0].mxu0
      %v637 = vadd.f32 %v572, %v636
      %v638 = vpop.f32.mrb[0].mxu0
      %v639 = vpop.f32.mrb[0].mxu0
      %v640 = vadd.f32 %v575, %v639
      %v641 = vpop.f32.mrb[0].mxu0
      %642 = vmatprep.mubr.bf16.mxu0 %v320
      %643 = vmatmul.mubr.bf16.gmra.mrb[0].mxu0 %v319
      %v644 = vpop.f32.mrb[0].mxu0
      %v645 = vadd.f32 %v580, %v644
      %v646 = vpop.f32.mrb[0].mxu0
      %v647 = vpop.f32.mrb[0].mxu0
      %v648 = vadd.f32 %v583, %v647
      %v649 = vpop.f32.mrb[0].mxu0
      %650 = vmatprep.mubr.bf16.mxu0 %v324
      %651 = vmatmul.mubr.bf16.gmra.mrb[0].mxu0 %v323
      %v652 = vpop.f32.mrb[0].mxu0
      %v653 = vadd.f32 %v588, %v652
      %v654 = vpop.f32.mrb[0].mxu0
      %v655 = vpop.f32.mrb[0].mxu0
      %v656 = vadd.f32 %v591, %v655
      %v657 = vpop.f32.mrb[0].mxu0
      %658 = vmatprep.mubr.bf16.mxu0 %v328
      %659 = vmatmul.mubr.bf16.gmra.mrb[0].mxu0 %v327
      %v660 = vpop.f32.mrb[0].mxu0
      %v661 = vadd.f32 %v596, %v660
      %v662 = vpop.f32.mrb[0].mxu0
      %v663 = vpop.f32.mrb[0].mxu0
      %v664 = vadd.f32 %v599, %v663
      %v665 = vpop.f32.mrb[0].mxu0
      %666 = vdwg.mxu0
      %v667 = vmax.f32 %v637, 0.0
      %v668 = vmax.f32 %v640, 0.0
      %v669 = vmax.f32 %v645, 0.0
      %v670 = vmax.f32 %v648, 0.0
      %v671 = vmax.f32 %v653, 0.0
      %v672 = vmax.f32 %v656, 0.0
      %v673 = vmax.f32 %v661, 0.0
      %v674 = vmax.f32 %v664, 0.0
      %675 = vst [vmem:[%s175] sm:$0xff] %v667
      %676 = vst [vmem:[%s175 + $0x8] sm:$0xff] %v668
      %677 = vst [vmem:[%s175 + $0x10] sm:$0xff] %v669
      %678 = vst [vmem:[%s175 + $0x18] sm:$0xff] %v670
      %679 = vst [vmem:[%s175 + $0x20] sm:$0xff] %v671
      %680 = vst [vmem:[%s175 + $0x28] sm:$0xff] %v672
      %681 = vst [vmem:[%s175 + $0x30] sm:$0xff] %v673
      %682 = vst [vmem:[%s175 + $0x38] sm:$0xff] %v674
      %s683 = smul.u32 8, %s14
      %p684 = scmp.lt.s32.totalorder %s683, 31
      %s685 = scalar_select %p684, %s683, 31
      %s686 = smul.addr %s685, 8
      %s687 = scalar_lea.vmem %s3, %s686
      // Predicated region
      $region33: #{downsampling_conv_block.1} parent=31 // pred_check
        %p688 = pneg %p100
      $region34: #{downsampling_conv_block.1} parent=31 // pred_check_branch
        %690 = sbr.rel (%p688) target = $region36
      $region35: #{downsampling_conv_block.1} parent=31 // pred_region
        %s691 = smul.u32 8, %s14
      $region36: #{downsampling_conv_block.1} parent=31 // pred_fallthru
        _
    $region32: #{downsampling_conv_block.1} parent=5 // pred_fallthru
      _
    %p692 = scmp.le.s32.totalorder 2, %s9
    // Predicated region
    $region37: #{downsampling_conv_block.1} parent=5 // pred_check
      %p693 = pneg %p692
    $region38: #{downsampling_conv_block.1} parent=5 // pred_check_branch
      %695 = sbr.rel (%p693) target = $region40
    $region39: #{downsampling_conv_block.1} parent=5 // pred_region
      %s696 = ssub.s32 %s9, 2
      // Predicated region
      $region41: #{downsampling_conv_block.1} parent=39 // pred_check
        %p697 = pneg %p106
      $region42: #{downsampling_conv_block.1} parent=39 // pred_check_branch
        %699 = sbr.rel (%p697) target = $region44
      $region43: #{downsampling_conv_block.1} parent=39 // pred_region
        %s700 = smul.u32 8, %s15
        %p701 = scmp.lt.s32.totalorder %s700, 31
        %s702 = scalar_select %p701, %s700, 31
        %s703 = smul.addr %s702, 8
        %s704 = scalar_lea.vmem %s3, %s703
      $region44: #{downsampling_conv_block.1} parent=39 // pred_fallthru
        _
    $region40: #{downsampling_conv_block.1} parent=5 // pred_fallthru
      _
  $region6: #{downsampling_conv_block.1} parent=0 // loop_footer
    %s13 = sadd.s32 1, %s9
  $region7: #{downsampling_conv_block.1} parent=0 // loop_footer_branch
    %8 = sbr.rel target = $region3
  $region8: #{downsampling_conv_block.1} parent=0 // loop_exit
    _

</llo_original>
